<compile_context>
chip_gen: v7x
topology: tpu7x:2x2x1
jax: 0.10.0
libtpu: 0.0.40
codegen_flags: <defaults>
</compile_context>

<pallas_src>
import functools

import jax
import jax.numpy as jnp
from jax import lax
from jax.experimental import pallas as pl
from jax.experimental.pallas import tpu as pltpu

_EPS = 1e-5                      # PyTorch LayerNorm default eps
_VMEM_HEADROOM = 8 << 20         # bytes kept free below vmem_limit_bytes


# --------------------------------------------------------------------------
# Kernel
# --------------------------------------------------------------------------
def _tokenization_kernel(x_ref, g1_ref, b1_ref, w_ref, fb_ref, g2_ref, b2_ref,
                         o_ref, *, true_dim, matmul_dtype):
    x = x_ref[...].astype(jnp.float32)                     # (TM, patch_dim)

    # --- LayerNorm over patch_dim (norm1), f32, E[x^2]-mu^2 form ---
    mu1 = jnp.mean(x, axis=-1, keepdims=True)
    ex1 = jnp.mean(x * x, axis=-1, keepdims=True)
    var1 = jnp.maximum(ex1 - mu1 * mu1, 0.0)
    xn = (x - mu1) * lax.rsqrt(var1 + _EPS)
    xn = xn * g1_ref[...] + b1_ref[...]                    # (TM, patch_dim)

    # --- Linear patch_dim -> dim_pad on the MXU.  Weight is in the native
    # PyTorch (dim_pad, patch_dim) orientation; contract both last dims. ---
    y = lax.dot_general(
        xn.astype(matmul_dtype), w_ref[...],
        dimension_numbers=(((1,), (1,)), ((), ())),
        preferred_element_type=jnp.float32)
    y = y + fb_ref[...]                                    # (TM, dim_pad)

    # --- LayerNorm over the TRUE dim (norm2).  Padded columns of y are
    # exactly zero (zero weight rows + zero bias), so plain sums divided by
    # true_dim give correct statistics and padded outputs stay zero. ---
    inv_d = 1.0 / float(true_dim)
    mu2 = jnp.sum(y, axis=-1, keepdims=True) * inv_d
    ex2 = jnp.sum(y * y, axis=-1, keepdims=True) * inv_d
    var2 = jnp.maximum(ex2 - mu2 * mu2, 0.0)
    yn = (y - mu2) * lax.rsqrt(var2 + _EPS)
    yn = yn * g2_ref[...] + b2_ref[...]

    o_ref[...] = yn.astype(o_ref.dtype)


# --------------------------------------------------------------------------
# Wrapper helpers
# --------------------------------------------------------------------------
def _patchify(x, patch_height, patch_width):
    # 'b c (h p1) (w p2) -> b (h w) (p1 p2 c)'
    b, c, H, W = x.shape
    h, w = H // patch_height, W // patch_width
    x = x.reshape(b, c, h, patch_height, w, patch_width)
    x = jnp.transpose(x, (0, 2, 4, 3, 5, 1))               # b h w p1 p2 c
    return x.reshape(b, h * w, patch_height * patch_width * c)


def _vmem_capacity_bytes():
    """Per-core VMEM capacity; conservative (v7x) fallback if query fails."""
    try:
        return int(pltpu.get_tpu_info().vmem_capacity_bytes)
    except Exception:
        return 64 * 1024 * 1024


def _choose_tm(rows, patch_dim, dim_pad, in_bytes, out_bytes, w_bytes,
               requested, tile_budget):
    """Largest multiple-of-8 row tile that fits the VMEM data budget."""
    # Double-buffered input / output tiles + double-buffered weight + the
    # tiny LN/bias vectors (double-buffered, f32).
    fixed = 2 * dim_pad * patch_dim * w_bytes
    fixed += 2 * 4 * (2 * patch_dim + 3 * dim_pad)
    per_row = 2 * (patch_dim * in_bytes + dim_pad * out_bytes)
    cap = max(8, (tile_budget - fixed) // per_row)
    tm = int(min(requested, cap, max(rows, 8)))
    tm = max(8, (tm // 8) * 8)
    # Keep >= 2 grid steps when possible so both v7x TensorCores get work.
    if tm >= rows and rows > 8:
        half = (rows + 1) // 2
        tm = max(8, ((half + 7) // 8) * 8)
    return tm


def _const_spec(shape):
    ndim = len(shape)
    return pl.BlockSpec(shape, lambda i, _n=ndim: (0,) * _n)


# --------------------------------------------------------------------------
# Forward
# --------------------------------------------------------------------------
@functools.partial(jax.jit, static_argnames=("patch_height", "patch_width",
                                             "block_rows", "use_bf16"))
def tokenization_forward(x, params, *, patch_height, patch_width,
                         block_rows=512, use_bf16=True):
    """x: (b, c, H, W).  Returns (b, num_patches, dim)."""
    g1, b1, w, fb, g2, b2 = (params["norm1_w"], params["norm1_b"],
                             params["fc1_w"], params["fc1_b"],
                             params["norm2_w"], params["norm2_b"])
    patch_dim = g1.shape[-1]
    dim = g2.shape[-1]
    out_dtype = x.dtype
    matmul_dtype = jnp.bfloat16 if use_bf16 else jnp.float32

    patches = _patchify(x, patch_height, patch_width)       # (b, n, patch_dim)
    b, n, _ = patches.shape
    rows = b * n
    flat = patches.reshape(rows, patch_dim)

    # ---- lane-dense output: pad dim up to a multiple of 128 -------------
    dim_pad = max(128, ((dim + 127) // 128) * 128)
    if dim_pad != dim:
        pd = dim_pad - dim
        w = jnp.pad(w, ((0, pd), (0, 0)))                   # zero weight rows
        fb = jnp.pad(fb, (0, pd))
        g2 = jnp.pad(g2, (0, pd))
        b2 = jnp.pad(b2, (0, pd))
    w = w.astype(matmul_dtype)                              # bf16 weight by default

    # ---- generation-aware tile size & VMEM limit -------------------------
    vmem_limit = (_vmem_capacity_bytes() * 3) // 4
    tile_budget = vmem_limit - _VMEM_HEADROOM
    tm = _choose_tm(rows, patch_dim, dim_pad,
                    flat.dtype.itemsize, jnp.dtype(out_dtype).itemsize,
                    w.dtype.itemsize, block_rows, tile_budget)

    rows_pad = pl.cdiv(rows, tm) * tm
    if rows_pad != rows:
        flat = jnp.pad(flat, ((0, rows_pad - rows), (0, 0)))

    # 2-D parameter views (lane dim last).
    g1_2d, b1_2d = g1.reshape(1, patch_dim), b1.reshape(1, patch_dim)
    fb_2d = fb.reshape(1, dim_pad)
    g2_2d, b2_2d = g2.reshape(1, dim_pad), b2.reshape(1, dim_pad)

    kernel = functools.partial(_tokenization_kernel,
                               true_dim=dim, matmul_dtype=matmul_dtype)

    out_flat = pl.pallas_call(
        kernel,
        out_shape=jax.ShapeDtypeStruct((rows_pad, dim_pad), out_dtype),
        grid_spec=pltpu.PrefetchScalarGridSpec(
            num_scalar_prefetch=0,
            grid=(rows_pad // tm,),
            in_specs=[
                pl.BlockSpec((tm, patch_dim), lambda i: (i, 0)),  # patch rows
                _const_spec((1, patch_dim)),                      # norm1 w
                _const_spec((1, patch_dim)),                      # norm1 b
                _const_spec((dim_pad, patch_dim)),                # fc1 W (native)
                _const_spec((1, dim_pad)),                        # fc1 b
                _const_spec((1, dim_pad)),                        # norm2 w
                _const_spec((1, dim_pad)),                        # norm2 b
            ],
            out_specs=pl.BlockSpec((tm, dim_pad), lambda i: (i, 0)),
        ),
        compiler_params=pltpu.CompilerParams(
            dimension_semantics=("parallel",),
            vmem_limit_bytes=int(vmem_limit)),
    )(flat, g1_2d, b1_2d, w, fb_2d, g2_2d, b2_2d)

    return out_flat[:rows, :dim].reshape(b, n, dim)


# --------------------------------------------------------------------------
# Params + pure-JAX reference
# --------------------------------------------------------------------------
def init_params(key, patch_dim, dim):
    k_w, k_b = jax.random.split(key)
    bound = 1.0 / (patch_dim ** 0.5)
    return {
        "norm1_w": jnp.ones((patch_dim,), jnp.float32),
        "norm1_b": jnp.zeros((patch_dim,), jnp.float32),
        # PyTorch Linear stores weight as (dim, patch_dim): y = x @ W.T + b
        "fc1_w": jax.random.uniform(k_w, (dim, patch_dim), jnp.float32,
                                    -bound, bound),
        "fc1_b": jax.random.uniform(k_b, (dim,), jnp.float32, -bound, bound),
        "norm2_w": jnp.ones((dim,), jnp.float32),
        "norm2_b": jnp.zeros((dim,), jnp.float32),
    }


def _reference(x, params, patch_height, patch_width):
    p = _patchify(x, patch_height, patch_width).astype(jnp.float32)
    mu = p.mean(-1, keepdims=True)
    var = ((p - mu) ** 2).mean(-1, keepdims=True)
    p = (p - mu) / jnp.sqrt(var + _EPS) * params["norm1_w"] + params["norm1_b"]
    y = p @ params["fc1_w"].T + params["fc1_b"]
    mu = y.mean(-1, keepdims=True)
    var = ((y - mu) ** 2).mean(-1, keepdims=True)
    return (y - mu) / jnp.sqrt(var + _EPS) * params["norm2_w"] + params["norm2_b"]


# --------------------------------------------------------------------------
# Self-test
# --------------------------------------------------------------------------
if __name__ == "__main__":
    # Small config: b=2, c=4, 16x16 image, 4x4 patches -> patch_dim=64, dim=32
    B, C, H, W = 2, 4, 16, 16
    PH, PW = 4, 4
    PATCH_DIM = PH * PW * C          # 64
    DIM = 32

    key = jax.random.PRNGKey(0)
    kx, kp = jax.random.split(key)
    x = jax.random.normal(kx, (B, C, H, W), jnp.float32)
    params = init_params(kp, PATCH_DIM, DIM)

    ref = _reference(x, params, PH, PW)
    n_patches = (H // PH) * (W // PW)

    # f32-matmul path: tight check of kernel logic (padding, LN math, tiling).
    out_f32 = jax.block_until_ready(
        tokenization_forward(x, params, patch_height=PH, patch_width=PW,
                             use_bf16=False))
    assert out_f32.shape == (B, n_patches, DIM)
    assert jnp.allclose(out_f32, ref, atol=1e-4, rtol=1e-4)

    # Default bf16-matmul path (production config): looser tolerance.
    out = jax.block_until_ready(
        tokenization_forward(x, params, patch_height=PH, patch_width=PW))
    assert out.shape == (B, n_patches, DIM)
    assert jnp.allclose(out, ref, atol=2e-2, rtol=2e-2)

    print("KERNEL_OK")
</pallas_src>

<mosaic_0001>
module attributes {stable_mosaic.version = 11 : i64} {
  func.func @_tokenization_kernel(%arg0: i32, %arg1: memref<16x64xf32, #tpu.memory_space<vmem>>, %arg2: memref<1x64xf32, #tpu.memory_space<vmem>>, %arg3: memref<1x64xf32, #tpu.memory_space<vmem>>, %arg4: memref<128x64xf32, #tpu.memory_space<vmem>>, %arg5: memref<1x128xf32, #tpu.memory_space<vmem>>, %arg6: memref<1x128xf32, #tpu.memory_space<vmem>>, %arg7: memref<1x128xf32, #tpu.memory_space<vmem>>, %arg8: memref<16x128xf32, #tpu.memory_space<vmem>>) attributes {dimension_semantics = [#tpu.dimension_semantics<parallel>], iteration_bounds = array<i64: 2>, scalar_prefetch = 0 : i64, scratch_operands = 0 : i64, tpu.core_type = #tpu.core_type<tc>, window_params = [{transform_indices = @transform_0, window_bounds = array<i64: 16, 64>}, {pipeline_mode = #tpu.pipeline_mode<synchronous>, transform_indices = @transform_1, window_bounds = array<i64: 1, 64>}, {pipeline_mode = #tpu.pipeline_mode<synchronous>, transform_indices = @transform_2, window_bounds = array<i64: 1, 64>}, {pipeline_mode = #tpu.pipeline_mode<synchronous>, transform_indices = @transform_3, window_bounds = array<i64: 128, 64>}, {pipeline_mode = #tpu.pipeline_mode<synchronous>, transform_indices = @transform_4, window_bounds = array<i64: 1, 128>}, {pipeline_mode = #tpu.pipeline_mode<synchronous>, transform_indices = @transform_5, window_bounds = array<i64: 1, 128>}, {pipeline_mode = #tpu.pipeline_mode<synchronous>, transform_indices = @transform_6, window_bounds = array<i64: 1, 128>}, {transform_indices = @transform_7, window_bounds = array<i64: 16, 128>}]} {
    %c0 = arith.constant 0 : index
    %c0_0 = arith.constant 0 : index
    %0 = vector.load %arg1[%c0, %c0_0] : memref<16x64xf32, #tpu.memory_space<vmem>>, vector<16x64xf32>
    %cst = arith.constant dense<0.000000e+00> : vector<16xf32>
    %1 = vector.multi_reduction <add>, %0, %cst [1] : vector<16x64xf32> to vector<16xf32>
    %2 = vector.shape_cast %1 : vector<16xf32> to vector<16x1xf32>
    %cst_1 = arith.constant 6.400000e+01 : f32
    %3 = vector.broadcast %cst_1 : f32 to vector<16x1xf32>
    %4 = arith.divf %2, %3 : vector<16x1xf32>
    %5 = arith.mulf %0, %0 : vector<16x64xf32>
    %cst_2 = arith.constant dense<0.000000e+00> : vector<16xf32>
    %6 = vector.multi_reduction <add>, %5, %cst_2 [1] : vector<16x64xf32> to vector<16xf32>
    %7 = vector.shape_cast %6 : vector<16xf32> to vector<16x1xf32>
    %cst_3 = arith.constant 6.400000e+01 : f32
    %8 = vector.broadcast %cst_3 : f32 to vector<16x1xf32>
    %9 = arith.divf %7, %8 : vector<16x1xf32>
    %10 = arith.mulf %4, %4 : vector<16x1xf32>
    %11 = arith.subf %9, %10 : vector<16x1xf32>
    %cst_4 = arith.constant 0.000000e+00 : f32
    %12 = vector.broadcast %cst_4 : f32 to vector<16x1xf32>
    %13 = arith.maximumf %11, %12 : vector<16x1xf32>
    %14 = vector.broadcast %4 : vector<16x1xf32> to vector<16x64xf32>
    %15 = arith.subf %0, %14 : vector<16x64xf32>
    %cst_5 = arith.constant 9.99999974E-6 : f32
    %16 = vector.broadcast %cst_5 : f32 to vector<16x1xf32>
    %17 = arith.addf %13, %16 : vector<16x1xf32>
    %18 = math.rsqrt %17 : vector<16x1xf32>
    %19 = vector.broadcast %18 : vector<16x1xf32> to vector<16x64xf32>
    %20 = arith.mulf %15, %19 : vector<16x64xf32>
    %c0_6 = arith.constant 0 : index
    %c0_7 = arith.constant 0 : index
    %21 = vector.load %arg2[%c0_6, %c0_7] : memref<1x64xf32, #tpu.memory_space<vmem>>, vector<1x64xf32>
    %22 = vector.broadcast %21 : vector<1x64xf32> to vector<16x64xf32>
    %23 = arith.mulf %20, %22 : vector<16x64xf32>
    %c0_8 = arith.constant 0 : index
    %c0_9 = arith.constant 0 : index
    %24 = vector.load %arg3[%c0_8, %c0_9] : memref<1x64xf32, #tpu.memory_space<vmem>>, vector<1x64xf32>
    %25 = vector.broadcast %24 : vector<1x64xf32> to vector<16x64xf32>
    %26 = arith.addf %23, %25 : vector<16x64xf32>
    %c0_10 = arith.constant 0 : index
    %c0_11 = arith.constant 0 : index
    %27 = vector.load %arg4[%c0_10, %c0_11] : memref<128x64xf32, #tpu.memory_space<vmem>>, vector<128x64xf32>
    %cst_12 = arith.constant dense<0.000000e+00> : vector<16x128xf32>
    %28 = tpu.matmul %26, %27, %cst_12 {dimension_numbers = #tpu.dot_dimension_numbers<[1], [1], [0], [0], [0, 0, 1, 0], [], []>} : vector<16x64xf32>, vector<128x64xf32>, vector<16x128xf32> -> vector<16x128xf32>
    %c0_13 = arith.constant 0 : index
    %c0_14 = arith.constant 0 : index
    %29 = vector.load %arg5[%c0_13, %c0_14] : memref<1x128xf32, #tpu.memory_space<vmem>>, vector<1x128xf32>
    %30 = vector.broadcast %29 : vector<1x128xf32> to vector<16x128xf32>
    %31 = arith.addf %28, %30 : vector<16x128xf32>
    %cst_15 = arith.constant dense<0.000000e+00> : vector<16xf32>
    %32 = vector.multi_reduction <add>, %31, %cst_15 [1] : vector<16x128xf32> to vector<16xf32>
    %33 = vector.shape_cast %32 : vector<16xf32> to vector<16x1xf32>
    %cst_16 = arith.constant 3.125000e-02 : f32
    %34 = vector.broadcast %cst_16 : f32 to vector<16x1xf32>
    %35 = arith.mulf %33, %34 : vector<16x1xf32>
    %36 = arith.mulf %31, %31 : vector<16x128xf32>
    %cst_17 = arith.constant dense<0.000000e+00> : vector<16xf32>
    %37 = vector.multi_reduction <add>, %36, %cst_17 [1] : vector<16x128xf32> to vector<16xf32>
    %38 = vector.shape_cast %37 : vector<16xf32> to vector<16x1xf32>
    %cst_18 = arith.constant 3.125000e-02 : f32
    %39 = vector.broadcast %cst_18 : f32 to vector<16x1xf32>
    %40 = arith.mulf %38, %39 : vector<16x1xf32>
    %41 = arith.mulf %35, %35 : vector<16x1xf32>
    %42 = arith.subf %40, %41 : vector<16x1xf32>
    %cst_19 = arith.constant 0.000000e+00 : f32
    %43 = vector.broadcast %cst_19 : f32 to vector<16x1xf32>
    %44 = arith.maximumf %42, %43 : vector<16x1xf32>
    %45 = vector.broadcast %35 : vector<16x1xf32> to vector<16x128xf32>
    %46 = arith.subf %31, %45 : vector<16x128xf32>
    %cst_20 = arith.constant 9.99999974E-6 : f32
    %47 = vector.broadcast %cst_20 : f32 to vector<16x1xf32>
    %48 = arith.addf %44, %47 : vector<16x1xf32>
    %49 = math.rsqrt %48 : vector<16x1xf32>
    %50 = vector.broadcast %49 : vector<16x1xf32> to vector<16x128xf32>
    %51 = arith.mulf %46, %50 : vector<16x128xf32>
    %c0_21 = arith.constant 0 : index
    %c0_22 = arith.constant 0 : index
    %52 = vector.load %arg6[%c0_21, %c0_22] : memref<1x128xf32, #tpu.memory_space<vmem>>, vector<1x128xf32>
    %53 = vector.broadcast %52 : vector<1x128xf32> to vector<16x128xf32>
    %54 = arith.mulf %51, %53 : vector<16x128xf32>
    %c0_23 = arith.constant 0 : index
    %c0_24 = arith.constant 0 : index
    %55 = vector.load %arg7[%c0_23, %c0_24] : memref<1x128xf32, #tpu.memory_space<vmem>>, vector<1x128xf32>
    %56 = vector.broadcast %55 : vector<1x128xf32> to vector<16x128xf32>
    %57 = arith.addf %54, %56 : vector<16x128xf32>
    %c0_25 = arith.constant 0 : index
    %c0_26 = arith.constant 0 : index
    %58 = vector.load %arg8[%c0_25, %c0_26] : memref<16x128xf32, #tpu.memory_space<vmem>>, vector<16x128xf32>
    tpu.vector_store %arg8[%c0_25, %c0_26], %57 {strides = array<i32>} : memref<16x128xf32, #tpu.memory_space<vmem>>, vector<16x128xf32>,
    return
  }
  func.func @transform_0(%arg0: i32) -> (i32, i32) {
    %c0_i32 = arith.constant 0 : i32
    %c0_i32_0 = arith.constant 0 : i32
    return %arg0, %c0_i32 : i32, i32
  }
  func.func @transform_1(%arg0: i32) -> (i32, i32) {
    %c0_i32 = arith.constant 0 : i32
    %c0_i32_0 = arith.constant 0 : i32
    %c0_i32_1 = arith.constant 0 : i32
    return %c0_i32, %c0_i32_0 : i32, i32
  }
  func.func @transform_2(%arg0: i32) -> (i32, i32) {
    %c0_i32 = arith.constant 0 : i32
    %c0_i32_0 = arith.constant 0 : i32
    %c0_i32_1 = arith.constant 0 : i32
    return %c0_i32, %c0_i32_0 : i32, i32
  }
  func.func @transform_3(%arg0: i32) -> (i32, i32) {
    %c0_i32 = arith.constant 0 : i32
    %c0_i32_0 = arith.constant 0 : i32
    %c0_i32_1 = arith.constant 0 : i32
    return %c0_i32, %c0_i32_0 : i32, i32
  }
  func.func @transform_4(%arg0: i32) -> (i32, i32) {
    %c0_i32 = arith.constant 0 : i32
    %c0_i32_0 = arith.constant 0 : i32
    %c0_i32_1 = arith.constant 0 : i32
    return %c0_i32, %c0_i32_0 : i32, i32
  }
  func.func @transform_5(%arg0: i32) -> (i32, i32) {
    %c0_i32 = arith.constant 0 : i32
    %c0_i32_0 = arith.constant 0 : i32
    %c0_i32_1 = arith.constant 0 : i32
    return %c0_i32, %c0_i32_0 : i32, i32
  }
  func.func @transform_6(%arg0: i32) -> (i32, i32) {
    %c0_i32 = arith.constant 0 : i32
    %c0_i32_0 = arith.constant 0 : i32
    %c0_i32_1 = arith.constant 0 : i32
    return %c0_i32, %c0_i32_0 : i32, i32
  }
  func.func @transform_7(%arg0: i32) -> (i32, i32) {
    %c0_i32 = arith.constant 0 : i32
    %c0_i32_0 = arith.constant 0 : i32
    return %arg0, %c0_i32 : i32, i32
  }
}

</mosaic_0001>

<llo_original>
// kernel: tokenization_forward.1
$region0: #{tokenization_forward.1}
  #allocation0 [shape = 'u32[]', space=smem, size = 0x4, offset = 0x4, fixed_abs, tag = 'smem constant byte address 0x4 - core index']
  #allocation1 [shape = 'u32[144,128]{1,0:T(1,128)}', space=vmem, size = 0x12000, scoped, tag = 'internal scratch']
  %s0 = inlined_call_operand.vmem [shape: f32[32,64], index: 0, kind: input, shape index: {}]
  %s1 = inlined_call_operand.vmem [shape: f32[1,64], index: 1, kind: input, shape index: {}]
  %s2 = inlined_call_operand.vmem [shape: f32[1,64], index: 2, kind: input, shape index: {}]
  %s3 = inlined_call_operand.vmem [shape: f32[128,64], index: 3, kind: input, shape index: {}]
  %s4 = inlined_call_operand.vmem [shape: f32[1,128], index: 4, kind: input, shape index: {}]
  %s5 = inlined_call_operand.vmem [shape: f32[1,128], index: 5, kind: input, shape index: {}]
  %s6 = inlined_call_operand.vmem [shape: f32[1,128], index: 6, kind: input, shape index: {}]
  %s7 = inlined_call_operand.hbm [shape: f32[32,128], index: 7, kind: output, shape index: {}]
  %s8 = sld [smem:[#allocation0]]
  $region61: #{tokenization_forward.1} parent=0
    _
  %s10 = ssub.s32 1, %s8
  %s11 = scalar_select 0, %s10, %s8
  $region1: #{tokenization_forward.1} parent=0
    #allocation2 [shape = 'u8[16384]{0}', space=vmem, size = 0x4000, scoped, tag = 'output window, operand 0']
    #allocation3 [shape = 's32[2]{0}', space=sflag, size = 0x8, scoped, tag = 'scoped memory for tokenization_forward.1']
    %12 = vsyncpa [#allocation3], 0
    %s13 = scalar_lea.sflag [#allocation3], 1
    %14 = vsyncpa %s13, 0
    loop: start=0, step=1, limit=4
    $region2: #{tokenization_forward.1} parent=1 // loop_pre_header
      _
    $region3: #{tokenization_forward.1} parent=1 // loop_header
      %s16 = sphi 0, %s20
      %p17 = scmp.ge.s32.totalorder %s16, 4
      %s26 = sphi 0, %s28
      %s29 = sphi 0, %s26
      %s30 = sphi 0, %s29
      %s46 = sphi 0, %s30
      %s50 = sphi 0, %s50
      %s52 = sphi 0, %s50
      %s53 = sphi 0, %s52
      %s67 = sphi 0, %s53
      %s71 = sphi 0, %s71
      %s73 = sphi 0, %s71
      %s74 = sphi 0, %s73
      %s88 = sphi 0, %s74
      %s92 = sphi 0, %s92
      %s94 = sphi 0, %s92
      %s95 = sphi 0, %s94
      %s109 = sphi 0, %s95
      %s113 = sphi 0, %s113
      %s115 = sphi 0, %s113
      %s116 = sphi 0, %s115
      %s130 = sphi 0, %s116
      %s134 = sphi 0, %s134
      %s136 = sphi 0, %s134
      %s137 = sphi 0, %s136
      %s151 = sphi 0, %s137
      %s155 = sphi 0, %s155
      %s157 = sphi 0, %s155
      %s158 = sphi 0, %s157
      %s172 = sphi 0, %s158
      %s178 = sphi 0, %s180
      %s181 = sphi 0, %s178
      %s182 = sphi 0, %s181
      %s198 = sphi 0, %s182
    $region4: #{tokenization_forward.1} parent=1 // loop_header_branch
      %19 = sbr.rel (%p17) target = $region8
    $region5: #{tokenization_forward.1} parent=1 // loop_body
      %s21 = ssub.s32 %s16, 1
      %s22 = ssub.s32 %s16, 2
      %s23 = sadd.s32 %s16, 1
      %s24 = ssub.s32 %s16, %s23
      %p25 = scmp.eq.s32.totalorder %s24, 0
      %s27 = sadd.s32 %s26, 1
      %s28 = scalar_select %p25, %s26, %s27
      %p31 = pneg %p25
      %p32 = scmp.eq.s32.totalorder %s16, 1
      %p33 = por %p31, %p32
      %p34 = scmp.ne.s32.totalorder %s26, %s29
      %p35 = scmp.eq.s32.totalorder %s16, 0
      %p36 = por %p34, %p35
      %p37 = scmp.ne.s32.totalorder %s26, %s29
      %p38 = scmp.eq.s32.totalorder %s21, 1
      %p39 = por %p37, %p38
      %p40 = scmp.ne.s32.totalorder %s29, %s30
      %p41 = scmp.eq.s32.totalorder %s21, 0
      %p42 = por %p40, %p41
      %p43 = scmp.ne.s32.totalorder %s29, %s30
      %p44 = scmp.eq.s32.totalorder %s22, 1
      %p45 = por %p43, %p44
      %p47 = scmp.ne.s32.totalorder %s30, %s46
      %p48 = scmp.eq.s32.totalorder %s22, 0
      %p49 = por %p47, %p48
      %s51 = sadd.s32 %s50, 1
      %p54 = scmp.eq.s32.totalorder %s16, 1
      %p55 = scmp.ne.s32.totalorder %s50, %s52
      %p56 = scmp.eq.s32.totalorder %s16, 0
      %p57 = por %p55, %p56
      %p58 = scmp.ne.s32.totalorder %s50, %s52
      %p59 = scmp.eq.s32.totalorder %s21, 1
      %p60 = por %p58, %p59
      %p61 = scmp.ne.s32.totalorder %s52, %s53
      %p62 = scmp.eq.s32.totalorder %s21, 0
      %p63 = por %p61, %p62
      %p64 = scmp.ne.s32.totalorder %s52, %s53
      %p65 = scmp.eq.s32.totalorder %s22, 1
      %p66 = por %p64, %p65
      %p68 = scmp.ne.s32.totalorder %s53, %s67
      %p69 = scmp.eq.s32.totalorder %s22, 0
      %p70 = por %p68, %p69
      %s72 = sadd.s32 %s71, 1
      %p75 = scmp.eq.s32.totalorder %s16, 1
      %p76 = scmp.ne.s32.totalorder %s71, %s73
      %p77 = scmp.eq.s32.totalorder %s16, 0
      %p78 = por %p76, %p77
      %p79 = scmp.ne.s32.totalorder %s71, %s73
      %p80 = scmp.eq.s32.totalorder %s21, 1
      %p81 = por %p79, %p80
      %p82 = scmp.ne.s32.totalorder %s73, %s74
      %p83 = scmp.eq.s32.totalorder %s21, 0
      %p84 = por %p82, %p83
      %p85 = scmp.ne.s32.totalorder %s73, %s74
      %p86 = scmp.eq.s32.totalorder %s22, 1
      %p87 = por %p85, %p86
      %p89 = scmp.ne.s32.totalorder %s74, %s88
      %p90 = scmp.eq.s32.totalorder %s22, 0
      %p91 = por %p89, %p90
      %s93 = sadd.s32 %s92, 1
      %p96 = scmp.eq.s32.totalorder %s16, 1
      %p97 = scmp.ne.s32.totalorder %s92, %s94
      %p98 = scmp.eq.s32.totalorder %s16, 0
      %p99 = por %p97, %p98
      %p100 = scmp.ne.s32.totalorder %s92, %s94
      %p101 = scmp.eq.s32.totalorder %s21, 1
      %p102 = por %p100, %p101
      %p103 = scmp.ne.s32.totalorder %s94, %s95
      %p104 = scmp.eq.s32.totalorder %s21, 0
      %p105 = por %p103, %p104
      %p106 = scmp.ne.s32.totalorder %s94, %s95
      %p107 = scmp.eq.s32.totalorder %s22, 1
      %p108 = por %p106, %p107
      %p110 = scmp.ne.s32.totalorder %s95, %s109
      %p111 = scmp.eq.s32.totalorder %s22, 0
      %p112 = por %p110, %p111
      %s114 = sadd.s32 %s113, 1
      %p117 = scmp.eq.s32.totalorder %s16, 1
      %p118 = scmp.ne.s32.totalorder %s113, %s115
      %p119 = scmp.eq.s32.totalorder %s16, 0
      %p120 = por %p118, %p119
      %p121 = scmp.ne.s32.totalorder %s113, %s115
      %p122 = scmp.eq.s32.totalorder %s21, 1
      %p123 = por %p121, %p122
      %p124 = scmp.ne.s32.totalorder %s115, %s116
      %p125 = scmp.eq.s32.totalorder %s21, 0
      %p126 = por %p124, %p125
      %p127 = scmp.ne.s32.totalorder %s115, %s116
      %p128 = scmp.eq.s32.totalorder %s22, 1
      %p129 = por %p127, %p128
      %p131 = scmp.ne.s32.totalorder %s116, %s130
      %p132 = scmp.eq.s32.totalorder %s22, 0
      %p133 = por %p131, %p132
      %s135 = sadd.s32 %s134, 1
      %p138 = scmp.eq.s32.totalorder %s16, 1
      %p139 = scmp.ne.s32.totalorder %s134, %s136
      %p140 = scmp.eq.s32.totalorder %s16, 0
      %p141 = por %p139, %p140
      %p142 = scmp.ne.s32.totalorder %s134, %s136
      %p143 = scmp.eq.s32.totalorder %s21, 1
      %p144 = por %p142, %p143
      %p145 = scmp.ne.s32.totalorder %s136, %s137
      %p146 = scmp.eq.s32.totalorder %s21, 0
      %p147 = por %p145, %p146
      %p148 = scmp.ne.s32.totalorder %s136, %s137
      %p149 = scmp.eq.s32.totalorder %s22, 1
      %p150 = por %p148, %p149
      %p152 = scmp.ne.s32.totalorder %s137, %s151
      %p153 = scmp.eq.s32.totalorder %s22, 0
      %p154 = por %p152, %p153
      %s156 = sadd.s32 %s155, 1
      %p159 = scmp.eq.s32.totalorder %s16, 1
      %p160 = scmp.ne.s32.totalorder %s155, %s157
      %p161 = scmp.eq.s32.totalorder %s16, 0
      %p162 = por %p160, %p161
      %p163 = scmp.ne.s32.totalorder %s155, %s157
      %p164 = scmp.eq.s32.totalorder %s21, 1
      %p165 = por %p163, %p164
      %p166 = scmp.ne.s32.totalorder %s157, %s158
      %p167 = scmp.eq.s32.totalorder %s21, 0
      %p168 = por %p166, %p167
      %p169 = scmp.ne.s32.totalorder %s157, %s158
      %p170 = scmp.eq.s32.totalorder %s22, 1
      %p171 = por %p169, %p170
      %p173 = scmp.ne.s32.totalorder %s158, %s172
      %p174 = scmp.eq.s32.totalorder %s22, 0
      %p175 = por %p173, %p174
      %s176 = ssub.s32 %s16, %s23
      %p177 = scmp.eq.s32.totalorder %s176, 0
      %s179 = sadd.s32 %s178, 1
      %s180 = scalar_select %p177, %s178, %s179
      %p183 = pneg %p177
      %p184 = scmp.eq.s32.totalorder %s16, 1
      %p185 = por %p183, %p184
      %p186 = scmp.ne.s32.totalorder %s178, %s181
      %p187 = scmp.eq.s32.totalorder %s16, 0
      %p188 = por %p186, %p187
      %p189 = scmp.ne.s32.totalorder %s178, %s181
      %p190 = scmp.eq.s32.totalorder %s21, 1
      %p191 = por %p189, %p190
      %p192 = scmp.ne.s32.totalorder %s181, %s182
      %p193 = scmp.eq.s32.totalorder %s21, 0
      %p194 = por %p192, %p193
      %p195 = scmp.ne.s32.totalorder %s181, %s182
      %p196 = scmp.eq.s32.totalorder %s22, 1
      %p197 = por %p195, %p196
      %p199 = scmp.ne.s32.totalorder %s182, %s198
      %p200 = scmp.eq.s32.totalorder %s22, 0
      %p201 = por %p199, %p200
      %p202 = scmp.le.s32.totalorder 1, %s16
      %p203 = scmp.lt.s32.totalorder %s16, 3
      %p204 = pnand %p202, %p203
      %p205 = pneg %p204
      // Predicated region
      $region9: #{tokenization_forward.1} parent=5 // pred_check
        _
      $region10: #{tokenization_forward.1} parent=5 // pred_check_branch
        %207 = sbr.rel (%p204) target = $region12
      $region11: #{tokenization_forward.1} parent=5 // pred_region
        %s208 = ssub.s32 %s16, 1
        // Predicated region
        $region13: #{tokenization_forward.1} parent=11 // pred_check
          %p209 = pneg %p63
        $region14: #{tokenization_forward.1} parent=11 // pred_check_branch
          %211 = sbr.rel (%p209) target = $region16
        $region15: #{tokenization_forward.1} parent=11 // pred_region
          _
        $region16: #{tokenization_forward.1} parent=11 // pred_fallthru
          _
        // Predicated region
        $region17: #{tokenization_forward.1} parent=11 // pred_check
          %p212 = pneg %p84
        $region18: #{tokenization_forward.1} parent=11 // pred_check_branch
          %214 = sbr.rel (%p212) target = $region20
        $region19: #{tokenization_forward.1} parent=11 // pred_region
          _
        $region20: #{tokenization_forward.1} parent=11 // pred_fallthru
          _
        // Predicated region
        $region21: #{tokenization_forward.1} parent=11 // pred_check
          %p215 = pneg %p105
        $region22: #{tokenization_forward.1} parent=11 // pred_check_branch
          %217 = sbr.rel (%p215) target = $region24
        $region23: #{tokenization_forward.1} parent=11 // pred_region
          _
        $region24: #{tokenization_forward.1} parent=11 // pred_fallthru
          _
        // Predicated region
        $region25: #{tokenization_forward.1} parent=11 // pred_check
          %p218 = pneg %p126
        $region26: #{tokenization_forward.1} parent=11 // pred_check_branch
          %220 = sbr.rel (%p218) target = $region28
        $region27: #{tokenization_forward.1} parent=11 // pred_region
          _
        $region28: #{tokenization_forward.1} parent=11 // pred_fallthru
          _
        // Predicated region
        $region29: #{tokenization_forward.1} parent=11 // pred_check
          %p221 = pneg %p147
        $region30: #{tokenization_forward.1} parent=11 // pred_check_branch
          %223 = sbr.rel (%p221) target = $region32
        $region31: #{tokenization_forward.1} parent=11 // pred_region
          _
        $region32: #{tokenization_forward.1} parent=11 // pred_fallthru
          _
        // Predicated region
        $region33: #{tokenization_forward.1} parent=11 // pred_check
          %p224 = pneg %p168
        $region34: #{tokenization_forward.1} parent=11 // pred_check_branch
          %226 = sbr.rel (%p224) target = $region36
        $region35: #{tokenization_forward.1} parent=11 // pred_region
          _
        $region36: #{tokenization_forward.1} parent=11 // pred_fallthru
          _
      $region12: #{tokenization_forward.1} parent=5 // pred_fallthru
        _
      %p227 = scmp.lt.s32.totalorder %s16, 2
      // Predicated region
      $region37: #{tokenization_forward.1} parent=5 // pred_check
        %p228 = pneg %p227
      $region38: #{tokenization_forward.1} parent=5 // pred_check_branch
        %230 = sbr.rel (%p228) target = $region40
      $region39: #{tokenization_forward.1} parent=5 // pred_region
        // Predicated region
        $region41: #{tokenization_forward.1} parent=39 // pred_check
          %p231 = pneg %p36
        $region42: #{tokenization_forward.1} parent=39 // pred_check_branch
          %233 = sbr.rel (%p231) target = $region44
        $region43: #{tokenization_forward.1} parent=39 // pred_region
          %s234 = smul.u32 2, %s16
          %p235 = scmp.lt.s32.totalorder %s234, 3
          %s236 = scalar_select %p235, %s234, 3
          %s237 = smul.addr %s236, 8
          %s238 = scalar_lea.vmem %s0, %s237
          %s239 = smul.u32 2, %s16
        $region44: #{tokenization_forward.1} parent=39 // pred_fallthru
          _
      $region40: #{tokenization_forward.1} parent=5 // pred_fallthru
        _
      %p240 = scmp.le.s32.totalorder 1, %s16
      %p241 = scmp.lt.s32.totalorder %s16, 3
      %p242 = pnand %p240, %p241
      %p243 = pneg %p242
      // Predicated region
      $region45: #{tokenization_forward.1} parent=5 // pred_check
        _
      $region46: #{tokenization_forward.1} parent=5 // pred_check_branch
        %245 = sbr.rel (%p242) target = $region48
      $region47: #{tokenization_forward.1} parent=5 // pred_region
        %s246 = ssub.s32 %s16, 1
        %s247 = smul.u32 2, %s21
        %p248 = scmp.lt.s32.totalorder %s247, 3
        %s249 = scalar_select %p248, %s247, 3
        %s250 = smul.addr %s249, 8
        %s251 = scalar_lea.vmem %s0, %s250
        %p252 = pneg %p42
        %p253 = pneg %p39
        %p254 = pneg %p63
        %p255 = pneg %p60
        %p256 = pneg %p84
        %p257 = pneg %p81
        %p258 = pneg %p105
        %p259 = pneg %p102
        %p260 = pneg %p126
        %p261 = pneg %p123
        %p262 = pneg %p147
        %p263 = pneg %p144
        %p264 = pneg %p168
        %p265 = pneg %p165
        %p266 = pneg %p194
        %p267 = pneg %p191
        %s268 = sand.u32 %s181, 1
        %s269 = scalar_lea.sflag [#allocation3], %s268
        %s270 = sand.u32 %s181, 1
        %s271 = smul.addr %s270, 16
        %s272 = scalar_lea.vmem [#allocation2], %s271
        %s273 = smul.u32 2, %s21
        %p274 = scmp.lt.s32.totalorder %s273, 3
        %s275 = scalar_select %p274, %s273, 3
        %s276 = smul.addr %s275, 8
        %s277 = scalar_lea.vmem %s0, %s276
        %s278 = smul.u32 2, %s21
        %s279 = smul.u32 2, %s21
        %v280 = vld [vmem:[%s277] sm:$0xff]
        %v281 = vld [vmem:[%s277 + $0x8] sm:$0xff]
        %vm282 = vcmask 523264
        %v283 = vsel %vm282, %v280, 0.0
        %284 = vadd.xlane.f32.xlu0 %v283
        %v285 = vpop.xlane.xlu0 %284
        %v286 = vsel %vm282, %v281, 0.0
        %287 = vadd.xlane.f32.xlu0 %v286
        %v288 = vpop.xlane.xlu0 %287
        %v289 = vrcp.pop 64.0
        %v290 = vmul.f32 %v285, %v289
        %v291 = vmul.f32 %v288, %v289
        %v292 = vmul.f32 %v280, %v280
        %v293 = vmul.f32 %v281, %v281
        %v294 = vsel %vm282, %v292, 0.0
        %295 = vadd.xlane.f32.xlu0 %v294
        %v296 = vpop.xlane.xlu0 %295
        %v297 = vsel %vm282, %v293, 0.0
        %298 = vadd.xlane.f32.xlu0 %v297
        %v299 = vpop.xlane.xlu0 %298
        %v300 = vmul.f32 %v296, %v289
        %v301 = vmul.f32 %v299, %v289
        %v302 = vmul.f32 %v290, %v290
        %v303 = vmul.f32 %v291, %v291
        %v304 = vsub.f32 %v300, %v302
        %v305 = vsub.f32 %v301, %v303
        %v306 = vmax.f32 %v304, 0.0
        %v307 = vmax.f32 %v305, 0.0
        %v308 = vsub.f32 %v280, %v290
        %v309 = vsub.f32 %v281, %v291
        %v310 = vadd.f32 %v306, 1e-05
        %v311 = vadd.f32 %v307, 1e-05
        %v312 = vrsqrt.pop %v310
        %v313 = vrsqrt.pop %v311
        %v314 = vmul.f32 %v308, %v312
        %v315 = vmul.f32 %v309, %v313
        %v316 = vld [vmem:[%s1] sm:$0x1]
        %v318 = vlaneseq
        %v319 = vshrl.u32 %v318, 7
        %v320 = vsub.s32 0, %v319
        %v321 = vrot.slane %v316, %v320
        %v323 = vmul.f32 %v314, %v321
        %v324 = vmul.f32 %v315, %v321
        %v325 = vld [vmem:[%s2] sm:$0x1]
        %v327 = vlaneseq
        %v328 = vshrl.u32 %v327, 7
        %v329 = vsub.s32 0, %v328
        %v330 = vrot.slane %v325, %v329
        %v332 = vadd.f32 %v323, %v330
        %v333 = vadd.f32 %v324, %v330
        %v334 = vld [vmem:[%s3] sm:$0xff]
        %v335 = vld [vmem:[%s3 + $0x8] sm:$0xff]
        %v336 = vld [vmem:[%s3 + $0x10] sm:$0xff]
        %v337 = vld [vmem:[%s3 + $0x18] sm:$0xff]
        %v338 = vld [vmem:[%s3 + $0x20] sm:$0xff]
        %v339 = vld [vmem:[%s3 + $0x28] sm:$0xff]
        %v340 = vld [vmem:[%s3 + $0x30] sm:$0xff]
        %v341 = vld [vmem:[%s3 + $0x38] sm:$0xff]
        %v342 = vld [vmem:[%s3 + $0x40] sm:$0xff]
        %v343 = vld [vmem:[%s3 + $0x48] sm:$0xff]
        %v344 = vld [vmem:[%s3 + $0x50] sm:$0xff]
        %v345 = vld [vmem:[%s3 + $0x58] sm:$0xff]
        %v346 = vld [vmem:[%s3 + $0x60] sm:$0xff]
        %v347 = vld [vmem:[%s3 + $0x68] sm:$0xff]
        %v348 = vld [vmem:[%s3 + $0x70] sm:$0xff]
        %v349 = vld [vmem:[%s3 + $0x78] sm:$0xff]
        %v350 = vld [vmem:[%s4] sm:$0x1]
        %v352 = vlaneseq
        %v353 = vshrl.u32 %v352, 7
        %v354 = vsub.s32 0, %v353
        %v355 = vrot.slane %v350, %v354
        %v358 = vsel %vm282, %v332, 0
        %v361 = vsel %vm282, %v333, 0
        %v364 = vsel %vm282, %v334, 0
        %v367 = vsel %vm282, %v335, 0
        %v370 = vsel %vm282, %v336, 0
        %v373 = vsel %vm282, %v337, 0
        %v376 = vsel %vm282, %v338, 0
        %v379 = vsel %vm282, %v339, 0
        %v382 = vsel %vm282, %v340, 0
        %v385 = vsel %vm282, %v341, 0
        %v388 = vsel %vm282, %v342, 0
        %v391 = vsel %vm282, %v343, 0
        %v394 = vsel %vm282, %v344, 0
        %v397 = vsel %vm282, %v345, 0
        %v400 = vsel %vm282, %v346, 0
        %v403 = vsel %vm282, %v347, 0
        %v406 = vsel %vm282, %v348, 0
        %v409 = vsel %vm282, %v349, 0
        %411 = vmatprep.subr.mxu0 0.0
        %412 = vmatpush1.xpose.msra.mxu0 %v364
        %413 = vmatprep.subr.mxu0 0.0
        %414 = vmatpush1.xpose.msra.mxu0 %v367
        %415 = vmatprep.subr.mxu0 0.0
        %416 = vmatpush1.xpose.msra.mxu0 %v370
        %417 = vmatprep.subr.mxu0 0.0
        %418 = vmatpush1.xpose.msra.mxu0 %v373
        %419 = vmatprep.subr.mxu0 0.0
        %420 = vmatpush1.xpose.msra.mxu0 %v376
        %421 = vmatprep.subr.mxu0 0.0
        %422 = vmatpush1.xpose.msra.mxu0 %v379
        %423 = vmatprep.subr.mxu0 0.0
        %424 = vmatpush1.xpose.msra.mxu0 %v382
        %425 = vmatprep.subr.mxu0 0.0
        %426 = vmatpush1.xpose.msra.mxu0 %v385
        %427 = vmatprep.subr.mxu0 0.0
        %428 = vmatpush1.xpose.msra.mxu0 %v388
        %429 = vmatprep.subr.mxu0 0.0
        %430 = vmatpush1.xpose.msra.mxu0 %v391
        %431 = vmatprep.subr.mxu0 0.0
        %432 = vmatpush1.xpose.msra.mxu0 %v394
        %433 = vmatprep.subr.mxu0 0.0
        %434 = vmatpush1.xpose.msra.mxu0 %v397
        %435 = vmatprep.subr.mxu0 0.0
        %436 = vmatpush1.xpose.msra.mxu0 %v400
        %437 = vmatprep.subr.mxu0 0.0
        %438 = vmatpush1.xpose.msra.mxu0 %v403
        %439 = vmatprep.subr.mxu0 0.0
        %440 = vmatpush1.xpose.msra.mxu0 %v406
        %441 = vmatprep.subr.mxu0 0.0
        %442 = vmatpush1.xpose.msra.mxu0 %v409
        %443 = vmatprep.subr.mxu0 0.0
        %444 = vmatpush1.xpose.msra.mxu0 0.0
        %445 = vmatprep.subr.mxu0 0.0
        %446 = vmatpush1.xpose.msra.mxu0 0.0
        %447 = vmatprep.subr.mxu0 0.0
        %448 = vmatpush1.xpose.msra.mxu0 0.0
        %449 = vmatprep.subr.mxu0 0.0
        %450 = vmatpush1.xpose.msra.mxu0 0.0
        %451 = vmatprep.subr.mxu0 0.0
        %452 = vmatpush1.xpose.msra.mxu0 0.0
        %453 = vmatprep.subr.mxu0 0.0
        %454 = vmatpush1.xpose.msra.mxu0 0.0
        %455 = vmatprep.subr.mxu0 0.0
        %456 = vmatpush1.xpose.msra.mxu0 0.0
        %457 = vmatprep.subr.mxu0 0.0
        %458 = vmatpush1.xpose.msra.mxu0 0.0
        %459 = vmatprep.subr.mxu0 0.0
        %460 = vmatpush1.xpose.msra.mxu0 0.0
        %461 = vmatprep.subr.mxu0 0.0
        %462 = vmatpush1.xpose.msra.mxu0 0.0
        %463 = vmatprep.subr.mxu0 0.0
        %464 = vmatpush1.xpose.msra.mxu0 0.0
        %465 = vmatprep.subr.mxu0 0.0
        %466 = vmatpush1.xpose.msra.mxu0 0.0
        %467 = vmatprep.subr.mxu0 0.0
        %468 = vmatpush1.xpose.msra.mxu0 0.0
        %469 = vmatprep.subr.mxu0 0.0
        %470 = vmatpush1.xpose.msra.mxu0 0.0
        %471 = vmatprep.subr.mxu0 0.0
        %472 = vmatpush1.xpose.msra.mxu0 0.0
        %473 = vmatprep.subr.mxu0 0.0
        %474 = vmatpush1.xpose.msra.mxu0 0.0
        %475 = vmatprep.mubr.f32.mxu0 0.0
        %476 = vmatmul.mubr.f32.gmra.mrb[0].mxu0 %v358
        %v477 = vpop.f32.mrb[0].mxu0
        %v478 = vadd.f32 %v355, %v477
        %v479 = vpop.f32.mrb[0].mxu0
        %480 = vmatprep.mubr.f32.mxu0 0.0
        %481 = vmatmul.mubr.f32.gmra.mrb[0].mxu0 %v361
        %v482 = vpop.f32.mrb[0].mxu0
        %v483 = vadd.f32 %v355, %v482
        %v484 = vpop.f32.mrb[0].mxu0
        %485 = vdwg.mxu0
        %486 = vadd.xlane.f32.xlu0 %v478
        %v487 = vpop.xlane.xlu0 %486
        %488 = vadd.xlane.f32.xlu0 %v483
        %v489 = vpop.xlane.xlu0 %488
        %v490 = vmul.f32 %v487, 0.03125
        %v491 = vmul.f32 %v489, 0.03125
        %v492 = vmul.f32 %v478, %v478
        %v493 = vmul.f32 %v483, %v483
        %494 = vadd.xlane.f32.xlu0 %v492
        %v495 = vpop.xlane.xlu0 %494
        %496 = vadd.xlane.f32.xlu0 %v493
        %v497 = vpop.xlane.xlu0 %496
        %v498 = vmul.f32 %v495, 0.03125
        %v499 = vmul.f32 %v497, 0.03125
        %v500 = vmul.f32 %v490, %v490
        %v501 = vmul.f32 %v491, %v491
        %v502 = vsub.f32 %v498, %v500
        %v503 = vsub.f32 %v499, %v501
        %v504 = vmax.f32 %v502, 0.0
        %v505 = vmax.f32 %v503, 0.0
        %v506 = vsub.f32 %v478, %v490
        %v507 = vsub.f32 %v483, %v491
        %v508 = vadd.f32 %v504, 1e-05
        %v509 = vadd.f32 %v505, 1e-05
        %v510 = vrsqrt.pop %v508
        %v511 = vrsqrt.pop %v509
        %v512 = vmul.f32 %v506, %v510
        %v513 = vmul.f32 %v507, %v511
        %v514 = vld [vmem:[%s5] sm:$0x1]
        %v516 = vlaneseq
        %v517 = vshrl.u32 %v516, 7
        %v518 = vsub.s32 0, %v517
        %v519 = vrot.slane %v514, %v518
        %v521 = vmul.f32 %v512, %v519
        %v522 = vmul.f32 %v513, %v519
        %v523 = vld [vmem:[%s6] sm:$0x1]
        %v525 = vlaneseq
        %v526 = vshrl.u32 %v525, 7
        %v527 = vsub.s32 0, %v526
        %v528 = vrot.slane %v523, %v527
        %v530 = vadd.f32 %v521, %v528
        %v531 = vadd.f32 %v522, %v528
        %532 = vst [vmem:[%s272] sm:$0xff] %v530
        %533 = vst [vmem:[%s272 + $0x8] sm:$0xff] %v531
        %s534 = sand.u32 %s181, 1
        %s535 = scalar_lea.sflag [#allocation3], %s534
        %s536 = sand.u32 %s181, 1
        %s537 = smul.addr %s536, 16
        %s538 = scalar_lea.vmem [#allocation2], %s537
        // Predicated region
        $region49: #{tokenization_forward.1} parent=47 // pred_check
          %p539 = pneg %p191
        $region50: #{tokenization_forward.1} parent=47 // pred_check_branch
          %541 = sbr.rel (%p539) target = $region52
        $region51: #{tokenization_forward.1} parent=47 // pred_region
          %s542 = smul.u32 2, %s21
          %s544 = ssub.s32 256, 256
          %545 = vsyncadd %s535, %s544
          %s546 = smul.addr %s542, 128
          %s547 = scalar_lea.hbm %s7, %s546
          %s548 = sshll.u32 %s538, 4
          %s549 = int_to_ptr.vmem [resolvable:$true] %s548
          %554 = dma.vmem_to_hbm [thread:$0]  %s549, 256, %s547, %s535, 128, 128, 8
        $region52: #{tokenization_forward.1} parent=47 // pred_fallthru
          _
      $region48: #{tokenization_forward.1} parent=5 // pred_fallthru
        _
      %p555 = scmp.le.s32.totalorder 2, %s16
      // Predicated region
      $region53: #{tokenization_forward.1} parent=5 // pred_check
        %p556 = pneg %p555
      $region54: #{tokenization_forward.1} parent=5 // pred_check_branch
        %558 = sbr.rel (%p556) target = $region56
      $region55: #{tokenization_forward.1} parent=5 // pred_region
        %s559 = ssub.s32 %s16, 2
        // Predicated region
        $region57: #{tokenization_forward.1} parent=55 // pred_check
          %p560 = pneg %p197
        $region58: #{tokenization_forward.1} parent=55 // pred_check_branch
          %562 = sbr.rel (%p560) target = $region60
        $region59: #{tokenization_forward.1} parent=55 // pred_region
          %s563 = sand.u32 %s182, 1
          %s564 = scalar_lea.sflag [#allocation3], %s563
          %s565 = sand.u32 %s182, 1
          %s566 = smul.addr %s565, 16
          %s567 = scalar_lea.vmem [#allocation2], %s566
          %568 = dma.done %s564, 256
        $region60: #{tokenization_forward.1} parent=55 // pred_fallthru
          _
      $region56: #{tokenization_forward.1} parent=5 // pred_fallthru
        _
    $region6: #{tokenization_forward.1} parent=1 // loop_footer
      %s20 = sadd.s32 1, %s16
    $region7: #{tokenization_forward.1} parent=1 // loop_footer_branch
      %15 = sbr.rel target = $region3
    $region8: #{tokenization_forward.1} parent=1 // loop_exit
      _
    %569 = vsyncpa [#allocation3], 1
    %s570 = scalar_lea.sflag [#allocation3], 1
    %571 = vsyncpa %s570, 1

</llo_original>
